<compile_context>
chip_gen: v5e
topology: v5e:2x2
jax: 0.10.0
libtpu: 0.0.40
codegen_flags: <defaults>
</compile_context>

<pallas_src>
import jax
import jax.numpy as jnp
from jax.experimental import pallas as pl
from jax.experimental.pallas import tpu as pltpu

# ---- hyperparameters implied by the module (globals in the original code);
# chosen so every feature dim is a multiple of 128 ---------------------------
BATCH = 256
Z_SIZE = 128
HS_G1 = 128
HS_G2 = 128
HS_G3 = 128
XOUT_SIZE = 256


def _leaky_relu(h, slope=0.2):
    return jnp.where(h > 0, h, slope * h)


def gan_lsq_fwd_kernel(z_ref,
                       w1_ref, b1_ref,
                       w2_ref, b2_ref,
                       w3_ref, b3_ref,
                       w4_ref, b4_ref,
                       o_ref):
    """Fused generator MLP forward for one batch tile.

    z arrives already in bf16 (cast in the producer), weights are bf16,
    MXU accumulates in f32, bias/LeakyReLU/tanh run in f32, output stored
    in o_ref.dtype (bf16).
    """
    h = jnp.dot(z_ref[...], w1_ref[...],
                preferred_element_type=jnp.float32) + b1_ref[...]
    h = _leaky_relu(h)

    h = jnp.dot(h.astype(jnp.bfloat16), w2_ref[...],
                preferred_element_type=jnp.float32) + b2_ref[...]
    h = _leaky_relu(h)

    h = jnp.dot(h.astype(jnp.bfloat16), w3_ref[...],
                preferred_element_type=jnp.float32) + b3_ref[...]
    h = _leaky_relu(h)

    h = jnp.dot(h.astype(jnp.bfloat16), w4_ref[...],
                preferred_element_type=jnp.float32) + b4_ref[...]
    o_ref[...] = jnp.tanh(h).astype(o_ref.dtype)


def _pick_batch_tile(B):
    """One grid step for small/medium batches; <=1024-row tiles for big ones.

    A second grid step is pure per-step overhead on single-TC v5e/v6e and
    (unverified-core-parallel) v7x, so no minimum step count is enforced.
    """
    if B <= 1024:
        return B
    for tb in (1024, 512, 256, 128, 64, 32, 16, 8):
        if B % tb == 0:
            return tb
    return B  # awkward batch size: run it in one (large) step


@jax.jit
def gan_lsq_forward(z, params):
    (w1, b1), (w2, b2), (w3, b3), (w4, b4) = params
    B = z.shape[0]
    z_size = w1.shape[0]
    xout = w4.shape[1]
    assert z.shape[1] == z_size, (z.shape, w1.shape)

    # Cast activations once in the producer (a single XLA op) so the kernel's
    # HBM read of z is bf16 and no per-tile cast is needed inside the kernel.
    z = z.astype(jnp.bfloat16)

    tb = _pick_batch_tile(B)
    grid = (B // tb,)

    def full2d(a):
        # grid-invariant full-array block (never re-fetched across steps)
        return pl.BlockSpec(a.shape, lambda i: (0, 0))

    # Cost estimate derived from the actual parameter shapes.
    flops = 2 * B * sum(w.shape[0] * w.shape[1] for w in (w1, w2, w3, w4))
    bytes_accessed = (
        z.size * 2                      # bf16 z read
        + B * xout * 2                  # bf16 output write
        + sum(a.size * a.dtype.itemsize
              for a in (w1, b1, w2, b2, w3, b3, w4, b4)))

    return pl.pallas_call(
        gan_lsq_fwd_kernel,
        out_shape=jax.ShapeDtypeStruct((B, xout), jnp.bfloat16),
        grid=grid,
        in_specs=[
            pl.BlockSpec((tb, z_size), lambda i: (i, 0)),
            full2d(w1), full2d(b1),
            full2d(w2), full2d(b2),
            full2d(w3), full2d(b3),
            full2d(w4), full2d(b4),
        ],
        out_specs=pl.BlockSpec((tb, xout), lambda i: (i, 0)),
        compiler_params=pltpu.CompilerParams(
            dimension_semantics=("parallel",)),
        cost_estimate=pl.CostEstimate(
            flops=flops,
            transcendentals=B * xout,
            bytes_accessed=bytes_accessed),
    )(z, w1, b1, w2, b2, w3, b3, w4, b4)


def init_linear(key, fan_in, fan_out):
    """PyTorch nn.Linear default init: U(-1/sqrt(fan_in), 1/sqrt(fan_in)).

    Weights stored as (in, out) so the kernel computes x @ W (equivalent to
    PyTorch's x @ W.T with its (out, in) layout).  Weights in bf16 (storage /
    MXU input), biases kept f32.
    """
    kw, kb = jax.random.split(key)
    bound = 1.0 / jnp.sqrt(float(fan_in))
    w = jax.random.uniform(kw, (fan_in, fan_out), jnp.float32, -bound, bound)
    b = jax.random.uniform(kb, (1, fan_out), jnp.float32, -bound, bound)
    return w.astype(jnp.bfloat16), b


def reference_forward(z, params):
    """Pure-JAX reference with the same bf16-I/O / f32-accumulate recipe."""
    (w1, b1), (w2, b2), (w3, b3), (w4, b4) = params

    def lin(h, w, b):
        return jnp.dot(h.astype(jnp.bfloat16), w,
                       preferred_element_type=jnp.float32) + b

    h = _leaky_relu(lin(z, w1, b1))
    h = _leaky_relu(lin(h, w2, b2))
    h = _leaky_relu(lin(h, w3, b3))
    return jnp.tanh(lin(h, w4, b4)).astype(jnp.bfloat16)


if __name__ == "__main__":
    key = jax.random.PRNGKey(0)
    kz, k1, k2, k3, k4 = jax.random.split(key, 5)

    z = jax.random.normal(kz, (BATCH, Z_SIZE), jnp.float32)
    params = (
        init_linear(k1, Z_SIZE, HS_G1),
        init_linear(k2, HS_G1, HS_G2),
        init_linear(k3, HS_G2, HS_G3),
        init_linear(k4, HS_G3, XOUT_SIZE),
    )

    out = jax.block_until_ready(gan_lsq_forward(z, params))

    ref = reference_forward(z, params)
    assert out.shape == (BATCH, XOUT_SIZE), out.shape
    assert out.dtype == jnp.bfloat16, out.dtype
    out_f32 = out.astype(jnp.float32)
    ref_f32 = ref.astype(jnp.float32)
    max_err = float(jnp.max(jnp.abs(out_f32 - ref_f32)))
    assert jnp.allclose(out_f32, ref_f32, atol=2e-2, rtol=2e-2), max_err

    print("KERNEL_OK")
</pallas_src>

<mosaic_0001>
module attributes {stable_mosaic.version = 11 : i64} {
  func.func @gan_lsq_fwd_kernel(%arg0: i32, %arg1: memref<256x128xbf16, #tpu.memory_space<vmem>>, %arg2: memref<128x128xbf16, #tpu.memory_space<vmem>>, %arg3: memref<1x128xf32, #tpu.memory_space<vmem>>, %arg4: memref<128x128xbf16, #tpu.memory_space<vmem>>, %arg5: memref<1x128xf32, #tpu.memory_space<vmem>>, %arg6: memref<128x128xbf16, #tpu.memory_space<vmem>>, %arg7: memref<1x128xf32, #tpu.memory_space<vmem>>, %arg8: memref<128x256xbf16, #tpu.memory_space<vmem>>, %arg9: memref<1x256xf32, #tpu.memory_space<vmem>>, %arg10: memref<256x256xbf16, #tpu.memory_space<vmem>>) attributes {dimension_semantics = [#tpu.dimension_semantics<parallel>], iteration_bounds = array<i64: 1>, scalar_prefetch = 0 : i64, scratch_operands = 0 : i64, tpu.core_type = #tpu.core_type<tc>, window_params = [{transform_indices = @transform_0, window_bounds = array<i64: 256, 128>}, {pipeline_mode = #tpu.pipeline_mode<synchronous>, transform_indices = @transform_1, window_bounds = array<i64: 128, 128>}, {pipeline_mode = #tpu.pipeline_mode<synchronous>, transform_indices = @transform_2, window_bounds = array<i64: 1, 128>}, {pipeline_mode = #tpu.pipeline_mode<synchronous>, transform_indices = @transform_3, window_bounds = array<i64: 128, 128>}, {pipeline_mode = #tpu.pipeline_mode<synchronous>, transform_indices = @transform_4, window_bounds = array<i64: 1, 128>}, {pipeline_mode = #tpu.pipeline_mode<synchronous>, transform_indices = @transform_5, window_bounds = array<i64: 128, 128>}, {pipeline_mode = #tpu.pipeline_mode<synchronous>, transform_indices = @transform_6, window_bounds = array<i64: 1, 128>}, {pipeline_mode = #tpu.pipeline_mode<synchronous>, transform_indices = @transform_7, window_bounds = array<i64: 128, 256>}, {pipeline_mode = #tpu.pipeline_mode<synchronous>, transform_indices = @transform_8, window_bounds = array<i64: 1, 256>}, {transform_indices = @transform_9, window_bounds = array<i64: 256, 256>}]} {
    %c0 = arith.constant 0 : index
    %c0_0 = arith.constant 0 : index
    %0 = vector.load %arg1[%c0, %c0_0] : memref<256x128xbf16, #tpu.memory_space<vmem>>, vector<256x128xbf16>
    %c0_1 = arith.constant 0 : index
    %c0_2 = arith.constant 0 : index
    %1 = vector.load %arg2[%c0_1, %c0_2] : memref<128x128xbf16, #tpu.memory_space<vmem>>, vector<128x128xbf16>
    %cst = arith.constant dense<0.000000e+00> : vector<256x128xf32>
    %2 = tpu.matmul %0, %1, %cst {dimension_numbers = #tpu.dot_dimension_numbers<[1], [0], [0], [1], [0, 0, 1, 1], [], []>} : vector<256x128xbf16>, vector<128x128xbf16>, vector<256x128xf32> -> vector<256x128xf32>
    %c0_3 = arith.constant 0 : index
    %c0_4 = arith.constant 0 : index
    %3 = vector.load %arg3[%c0_3, %c0_4] : memref<1x128xf32, #tpu.memory_space<vmem>>, vector<1x128xf32>
    %4 = vector.broadcast %3 : vector<1x128xf32> to vector<256x128xf32>
    %5 = arith.addf %2, %4 : vector<256x128xf32>
    %cst_5 = arith.constant 0.000000e+00 : f32
    %6 = vector.broadcast %cst_5 : f32 to vector<256x128xf32>
    %7 = arith.cmpf ogt, %5, %6 : vector<256x128xf32>
    %cst_6 = arith.constant 2.000000e-01 : f32
    %8 = vector.broadcast %cst_6 : f32 to vector<256x128xf32>
    %9 = arith.mulf %8, %5 : vector<256x128xf32>
    %10 = arith.select %7, %5, %9 : vector<256x128xi1>, vector<256x128xf32>
    %11 = arith.truncf %10 : vector<256x128xf32> to vector<256x128xbf16>
    %c0_7 = arith.constant 0 : index
    %c0_8 = arith.constant 0 : index
    %12 = vector.load %arg4[%c0_7, %c0_8] : memref<128x128xbf16, #tpu.memory_space<vmem>>, vector<128x128xbf16>
    %cst_9 = arith.constant dense<0.000000e+00> : vector<256x128xf32>
    %13 = tpu.matmul %11, %12, %cst_9 {dimension_numbers = #tpu.dot_dimension_numbers<[1], [0], [0], [1], [0, 0, 1, 1], [], []>} : vector<256x128xbf16>, vector<128x128xbf16>, vector<256x128xf32> -> vector<256x128xf32>
    %c0_10 = arith.constant 0 : index
    %c0_11 = arith.constant 0 : index
    %14 = vector.load %arg5[%c0_10, %c0_11] : memref<1x128xf32, #tpu.memory_space<vmem>>, vector<1x128xf32>
    %15 = vector.broadcast %14 : vector<1x128xf32> to vector<256x128xf32>
    %16 = arith.addf %13, %15 : vector<256x128xf32>
    %cst_12 = arith.constant 0.000000e+00 : f32
    %17 = vector.broadcast %cst_12 : f32 to vector<256x128xf32>
    %18 = arith.cmpf ogt, %16, %17 : vector<256x128xf32>
    %cst_13 = arith.constant 2.000000e-01 : f32
    %19 = vector.broadcast %cst_13 : f32 to vector<256x128xf32>
    %20 = arith.mulf %19, %16 : vector<256x128xf32>
    %21 = arith.select %18, %16, %20 : vector<256x128xi1>, vector<256x128xf32>
    %22 = arith.truncf %21 : vector<256x128xf32> to vector<256x128xbf16>
    %c0_14 = arith.constant 0 : index
    %c0_15 = arith.constant 0 : index
    %23 = vector.load %arg6[%c0_14, %c0_15] : memref<128x128xbf16, #tpu.memory_space<vmem>>, vector<128x128xbf16>
    %cst_16 = arith.constant dense<0.000000e+00> : vector<256x128xf32>
    %24 = tpu.matmul %22, %23, %cst_16 {dimension_numbers = #tpu.dot_dimension_numbers<[1], [0], [0], [1], [0, 0, 1, 1], [], []>} : vector<256x128xbf16>, vector<128x128xbf16>, vector<256x128xf32> -> vector<256x128xf32>
    %c0_17 = arith.constant 0 : index
    %c0_18 = arith.constant 0 : index
    %25 = vector.load %arg7[%c0_17, %c0_18] : memref<1x128xf32, #tpu.memory_space<vmem>>, vector<1x128xf32>
    %26 = vector.broadcast %25 : vector<1x128xf32> to vector<256x128xf32>
    %27 = arith.addf %24, %26 : vector<256x128xf32>
    %cst_19 = arith.constant 0.000000e+00 : f32
    %28 = vector.broadcast %cst_19 : f32 to vector<256x128xf32>
    %29 = arith.cmpf ogt, %27, %28 : vector<256x128xf32>
    %cst_20 = arith.constant 2.000000e-01 : f32
    %30 = vector.broadcast %cst_20 : f32 to vector<256x128xf32>
    %31 = arith.mulf %30, %27 : vector<256x128xf32>
    %32 = arith.select %29, %27, %31 : vector<256x128xi1>, vector<256x128xf32>
    %33 = arith.truncf %32 : vector<256x128xf32> to vector<256x128xbf16>
    %c0_21 = arith.constant 0 : index
    %c0_22 = arith.constant 0 : index
    %34 = vector.load %arg8[%c0_21, %c0_22] : memref<128x256xbf16, #tpu.memory_space<vmem>>, vector<128x256xbf16>
    %cst_23 = arith.constant dense<0.000000e+00> : vector<256x256xf32>
    %35 = tpu.matmul %33, %34, %cst_23 {dimension_numbers = #tpu.dot_dimension_numbers<[1], [0], [0], [1], [0, 0, 1, 1], [], []>} : vector<256x128xbf16>, vector<128x256xbf16>, vector<256x256xf32> -> vector<256x256xf32>
    %c0_24 = arith.constant 0 : index
    %c0_25 = arith.constant 0 : index
    %36 = vector.load %arg9[%c0_24, %c0_25] : memref<1x256xf32, #tpu.memory_space<vmem>>, vector<1x256xf32>
    %37 = vector.broadcast %36 : vector<1x256xf32> to vector<256x256xf32>
    %38 = arith.addf %35, %37 : vector<256x256xf32>
    %39 = math.tanh %38 : vector<256x256xf32>
    %40 = arith.truncf %39 : vector<256x256xf32> to vector<256x256xbf16>
    %c0_26 = arith.constant 0 : index
    %c0_27 = arith.constant 0 : index
    %41 = vector.load %arg10[%c0_26, %c0_27] : memref<256x256xbf16, #tpu.memory_space<vmem>>, vector<256x256xbf16>
    tpu.vector_store %arg10[%c0_26, %c0_27], %40 {strides = array<i32>} : memref<256x256xbf16, #tpu.memory_space<vmem>>, vector<256x256xbf16>,
    return
  }
  func.func @transform_0(%arg0: i32) -> (i32, i32) {
    %c0_i32 = arith.constant 0 : i32
    %c0_i32_0 = arith.constant 0 : i32
    return %arg0, %c0_i32 : i32, i32
  }
  func.func @transform_1(%arg0: i32) -> (i32, i32) {
    %c0_i32 = arith.constant 0 : i32
    %c0_i32_0 = arith.constant 0 : i32
    %c0_i32_1 = arith.constant 0 : i32
    return %c0_i32, %c0_i32_0 : i32, i32
  }
  func.func @transform_2(%arg0: i32) -> (i32, i32) {
    %c0_i32 = arith.constant 0 : i32
    %c0_i32_0 = arith.constant 0 : i32
    %c0_i32_1 = arith.constant 0 : i32
    return %c0_i32, %c0_i32_0 : i32, i32
  }
  func.func @transform_3(%arg0: i32) -> (i32, i32) {
    %c0_i32 = arith.constant 0 : i32
    %c0_i32_0 = arith.constant 0 : i32
    %c0_i32_1 = arith.constant 0 : i32
    return %c0_i32, %c0_i32_0 : i32, i32
  }
  func.func @transform_4(%arg0: i32) -> (i32, i32) {
    %c0_i32 = arith.constant 0 : i32
    %c0_i32_0 = arith.constant 0 : i32
    %c0_i32_1 = arith.constant 0 : i32
    return %c0_i32, %c0_i32_0 : i32, i32
  }
  func.func @transform_5(%arg0: i32) -> (i32, i32) {
    %c0_i32 = arith.constant 0 : i32
    %c0_i32_0 = arith.constant 0 : i32
    %c0_i32_1 = arith.constant 0 : i32
    return %c0_i32, %c0_i32_0 : i32, i32
  }
  func.func @transform_6(%arg0: i32) -> (i32, i32) {
    %c0_i32 = arith.constant 0 : i32
    %c0_i32_0 = arith.constant 0 : i32
    %c0_i32_1 = arith.constant 0 : i32
    return %c0_i32, %c0_i32_0 : i32, i32
  }
  func.func @transform_7(%arg0: i32) -> (i32, i32) {
    %c0_i32 = arith.constant 0 : i32
    %c0_i32_0 = arith.constant 0 : i32
    %c0_i32_1 = arith.constant 0 : i32
    return %c0_i32, %c0_i32_0 : i32, i32
  }
  func.func @transform_8(%arg0: i32) -> (i32, i32) {
    %c0_i32 = arith.constant 0 : i32
    %c0_i32_0 = arith.constant 0 : i32
    %c0_i32_1 = arith.constant 0 : i32
    return %c0_i32, %c0_i32_0 : i32, i32
  }
  func.func @transform_9(%arg0: i32) -> (i32, i32) {
    %c0_i32 = arith.constant 0 : i32
    %c0_i32_0 = arith.constant 0 : i32
    return %arg0, %c0_i32 : i32, i32
  }
}

</mosaic_0001>

<llo_original>
// kernel: gan_lsq_forward.1
$region0: #{gan_lsq_forward.1}
  #allocation0 [shape = 'u32[]', space=smem, size = 0x4, offset = 0x4, fixed_abs, tag = 'smem constant byte address 0x4 - core index']
  #allocation1 [shape = 'u32[72,128]{1,0:T(1,128)}', space=vmem, size = 0x9000, scoped, tag = 'internal scratch']
  %s0 = inlined_call_operand.vmem [shape: bf16[256,128], index: 0, kind: input, shape index: {}]
  %s1 = inlined_call_operand.vmem [shape: bf16[128,128], index: 1, kind: input, shape index: {}]
  %s2 = inlined_call_operand.vmem [shape: f32[1,128], index: 2, kind: input, shape index: {}]
  %s3 = inlined_call_operand.vmem [shape: bf16[128,128], index: 3, kind: input, shape index: {}]
  %s4 = inlined_call_operand.vmem [shape: f32[1,128], index: 4, kind: input, shape index: {}]
  %s5 = inlined_call_operand.vmem [shape: bf16[128,128], index: 5, kind: input, shape index: {}]
  %s6 = inlined_call_operand.vmem [shape: f32[1,128], index: 6, kind: input, shape index: {}]
  %s7 = inlined_call_operand.vmem [shape: bf16[128,256], index: 7, kind: input, shape index: {}]
  %s8 = inlined_call_operand.vmem [shape: f32[1,256], index: 8, kind: input, shape index: {}]
  %s9 = inlined_call_operand.hbm [shape: bf16[256,256], index: 9, kind: output, shape index: {}]
  %s10 = sld [smem:[#allocation0]]
  $region46: #{gan_lsq_forward.1} parent=0
    _
  %s12 = ssub.s32 1, %s10
  %s13 = scalar_select 0, %s12, %s10
  $region1: #{gan_lsq_forward.1} parent=0
    #allocation2 [shape = 'u8[131072]{0}', space=vmem, size = 0x20000, scoped, tag = 'output window, operand 0, single buffered']
    #allocation3 [shape = 's32[1]{0}', space=sflag, size = 0x4, scoped, tag = 'scoped memory for gan_lsq_forward.1']
    %14 = vsyncpa [#allocation3], 0
    // Predicated region
    $region2: #{gan_lsq_forward.1} parent=1 // pred_check
      _
    $region3: #{gan_lsq_forward.1} parent=1 // pred_check_branch
      %16 = sbr.rel (0) target = $region5
    $region4: #{gan_lsq_forward.1} parent=1 // pred_region
      _
    $region5: #{gan_lsq_forward.1} parent=1 // pred_fallthru
      _
    // Predicated region
    $region6: #{gan_lsq_forward.1} parent=1 // pred_check
      _
    $region7: #{gan_lsq_forward.1} parent=1 // pred_check_branch
      %18 = sbr.rel (0) target = $region9
    $region8: #{gan_lsq_forward.1} parent=1 // pred_region
      _
    $region9: #{gan_lsq_forward.1} parent=1 // pred_fallthru
      _
    // Predicated region
    $region10: #{gan_lsq_forward.1} parent=1 // pred_check
      _
    $region11: #{gan_lsq_forward.1} parent=1 // pred_check_branch
      %20 = sbr.rel (0) target = $region13
    $region12: #{gan_lsq_forward.1} parent=1 // pred_region
      _
    $region13: #{gan_lsq_forward.1} parent=1 // pred_fallthru
      _
    // Predicated region
    $region14: #{gan_lsq_forward.1} parent=1 // pred_check
      _
    $region15: #{gan_lsq_forward.1} parent=1 // pred_check_branch
      %22 = sbr.rel (0) target = $region17
    $region16: #{gan_lsq_forward.1} parent=1 // pred_region
      _
    $region17: #{gan_lsq_forward.1} parent=1 // pred_fallthru
      _
    // Predicated region
    $region18: #{gan_lsq_forward.1} parent=1 // pred_check
      _
    $region19: #{gan_lsq_forward.1} parent=1 // pred_check_branch
      %24 = sbr.rel (0) target = $region21
    $region20: #{gan_lsq_forward.1} parent=1 // pred_region
      _
    $region21: #{gan_lsq_forward.1} parent=1 // pred_fallthru
      _
    // Predicated region
    $region22: #{gan_lsq_forward.1} parent=1 // pred_check
      _
    $region23: #{gan_lsq_forward.1} parent=1 // pred_check_branch
      %26 = sbr.rel (0) target = $region25
    $region24: #{gan_lsq_forward.1} parent=1 // pred_region
      _
    $region25: #{gan_lsq_forward.1} parent=1 // pred_fallthru
      _
    // Predicated region
    $region26: #{gan_lsq_forward.1} parent=1 // pred_check
      _
    $region27: #{gan_lsq_forward.1} parent=1 // pred_check_branch
      %28 = sbr.rel (0) target = $region29
    $region28: #{gan_lsq_forward.1} parent=1 // pred_region
      _
    $region29: #{gan_lsq_forward.1} parent=1 // pred_fallthru
      _
    // Predicated region
    $region30: #{gan_lsq_forward.1} parent=1 // pred_check
      _
    $region31: #{gan_lsq_forward.1} parent=1 // pred_check_branch
      %30 = sbr.rel (0) target = $region33
    $region32: #{gan_lsq_forward.1} parent=1 // pred_region
      _
    $region33: #{gan_lsq_forward.1} parent=1 // pred_fallthru
      _
    // Predicated region
    $region34: #{gan_lsq_forward.1} parent=1 // pred_check
      _
    $region35: #{gan_lsq_forward.1} parent=1 // pred_check_branch
      %32 = sbr.rel (0) target = $region37
    $region36: #{gan_lsq_forward.1} parent=1 // pred_region
      _
    $region37: #{gan_lsq_forward.1} parent=1 // pred_fallthru
      _
    %v33 = vld [vmem:[%s0] sm:$0xf]
    %v34 = vld [vmem:[%s0 + $0x4] sm:$0xf]
    %v35 = vld [vmem:[%s0 + $0x8] sm:$0xf]
    %v36 = vld [vmem:[%s0 + $0xc] sm:$0xf]
    %v37 = vld [vmem:[%s0 + $0x10] sm:$0xf]
    %v38 = vld [vmem:[%s0 + $0x14] sm:$0xf]
    %v39 = vld [vmem:[%s0 + $0x18] sm:$0xf]
    %v40 = vld [vmem:[%s0 + $0x1c] sm:$0xf]
    %v41 = vld [vmem:[%s0 + $0x20] sm:$0xf]
    %v42 = vld [vmem:[%s0 + $0x24] sm:$0xf]
    %v43 = vld [vmem:[%s0 + $0x28] sm:$0xf]
    %v44 = vld [vmem:[%s0 + $0x2c] sm:$0xf]
    %v45 = vld [vmem:[%s0 + $0x30] sm:$0xf]
    %v46 = vld [vmem:[%s0 + $0x34] sm:$0xf]
    %v47 = vld [vmem:[%s0 + $0x38] sm:$0xf]
    %v48 = vld [vmem:[%s0 + $0x3c] sm:$0xf]
    %v49 = vld [vmem:[%s0 + $0x40] sm:$0xf]
    %v50 = vld [vmem:[%s0 + $0x44] sm:$0xf]
    %v51 = vld [vmem:[%s0 + $0x48] sm:$0xf]
    %v52 = vld [vmem:[%s0 + $0x4c] sm:$0xf]
    %v53 = vld [vmem:[%s0 + $0x50] sm:$0xf]
    %v54 = vld [vmem:[%s0 + $0x54] sm:$0xf]
    %v55 = vld [vmem:[%s0 + $0x58] sm:$0xf]
    %v56 = vld [vmem:[%s0 + $0x5c] sm:$0xf]
    %v57 = vld [vmem:[%s0 + $0x60] sm:$0xf]
    %v58 = vld [vmem:[%s0 + $0x64] sm:$0xf]
    %v59 = vld [vmem:[%s0 + $0x68] sm:$0xf]
    %v60 = vld [vmem:[%s0 + $0x6c] sm:$0xf]
    %v61 = vld [vmem:[%s0 + $0x70] sm:$0xf]
    %v62 = vld [vmem:[%s0 + $0x74] sm:$0xf]
    %v63 = vld [vmem:[%s0 + $0x78] sm:$0xf]
    %v64 = vld [vmem:[%s0 + $0x7c] sm:$0xf]
    %v65 = vld [vmem:[%s1] sm:$0xf]
    %v66 = vld [vmem:[%s1 + $0x4] sm:$0xf]
    %v67 = vld [vmem:[%s1 + $0x8] sm:$0xf]
    %v68 = vld [vmem:[%s1 + $0xc] sm:$0xf]
    %v69 = vld [vmem:[%s1 + $0x10] sm:$0xf]
    %v70 = vld [vmem:[%s1 + $0x14] sm:$0xf]
    %v71 = vld [vmem:[%s1 + $0x18] sm:$0xf]
    %v72 = vld [vmem:[%s1 + $0x1c] sm:$0xf]
    %v73 = vld [vmem:[%s1 + $0x20] sm:$0xf]
    %v74 = vld [vmem:[%s1 + $0x24] sm:$0xf]
    %v75 = vld [vmem:[%s1 + $0x28] sm:$0xf]
    %v76 = vld [vmem:[%s1 + $0x2c] sm:$0xf]
    %v77 = vld [vmem:[%s1 + $0x30] sm:$0xf]
    %v78 = vld [vmem:[%s1 + $0x34] sm:$0xf]
    %v79 = vld [vmem:[%s1 + $0x38] sm:$0xf]
    %v80 = vld [vmem:[%s1 + $0x3c] sm:$0xf]
    %v81 = vld [vmem:[%s2] sm:$0x1]
    %v83 = vperm.slane %v81, 0
    %v117 = vunpack.c.l.b16 %v33
    %v118 = vunpack.c.l.b16 %v34
    %v119 = vunpack.c.l.b16 %v35
    %v120 = vunpack.c.l.b16 %v36
    %v121 = vunpack.c.l.b16 %v37
    %v122 = vunpack.c.l.b16 %v38
    %v123 = vunpack.c.l.b16 %v39
    %v124 = vunpack.c.l.b16 %v40
    %v125 = vunpack.c.l.b16 %v41
    %v126 = vunpack.c.l.b16 %v42
    %v127 = vunpack.c.l.b16 %v43
    %v128 = vunpack.c.l.b16 %v44
    %v129 = vunpack.c.l.b16 %v45
    %v130 = vunpack.c.l.b16 %v46
    %v131 = vunpack.c.l.b16 %v47
    %v132 = vunpack.c.l.b16 %v48
    %v133 = vunpack.c.l.b16 %v49
    %v134 = vunpack.c.l.b16 %v50
    %v135 = vunpack.c.l.b16 %v51
    %v136 = vunpack.c.l.b16 %v52
    %v137 = vunpack.c.l.b16 %v53
    %v138 = vunpack.c.l.b16 %v54
    %v139 = vunpack.c.l.b16 %v55
    %v140 = vunpack.c.l.b16 %v56
    %v141 = vunpack.c.l.b16 %v57
    %v142 = vunpack.c.l.b16 %v58
    %v143 = vunpack.c.l.b16 %v59
    %v144 = vunpack.c.l.b16 %v60
    %v145 = vunpack.c.l.b16 %v61
    %v146 = vunpack.c.l.b16 %v62
    %v147 = vunpack.c.l.b16 %v63
    %v148 = vunpack.c.l.b16 %v64
    %v149 = vpack.c.b16 %v118, %v117
    %v150 = vpack.c.b16 %v120, %v119
    %v151 = vpack.c.b16 %v122, %v121
    %v152 = vpack.c.b16 %v124, %v123
    %v153 = vpack.c.b16 %v126, %v125
    %v154 = vpack.c.b16 %v128, %v127
    %v155 = vpack.c.b16 %v130, %v129
    %v156 = vpack.c.b16 %v132, %v131
    %v157 = vpack.c.b16 %v134, %v133
    %v158 = vpack.c.b16 %v136, %v135
    %v159 = vpack.c.b16 %v138, %v137
    %v160 = vpack.c.b16 %v140, %v139
    %v161 = vpack.c.b16 %v142, %v141
    %v162 = vpack.c.b16 %v144, %v143
    %v163 = vpack.c.b16 %v146, %v145
    %v164 = vpack.c.b16 %v148, %v147
    %v197 = vunpack.c.l.b16 %v65
    %v198 = vunpack.c.l.b16 %v66
    %v199 = vunpack.c.l.b16 %v67
    %v200 = vunpack.c.l.b16 %v68
    %v201 = vunpack.c.l.b16 %v69
    %v202 = vunpack.c.l.b16 %v70
    %v203 = vunpack.c.l.b16 %v71
    %v204 = vunpack.c.l.b16 %v72
    %v205 = vunpack.c.l.b16 %v73
    %v206 = vunpack.c.l.b16 %v74
    %v207 = vunpack.c.l.b16 %v75
    %v208 = vunpack.c.l.b16 %v76
    %v209 = vunpack.c.l.b16 %v77
    %v210 = vunpack.c.l.b16 %v78
    %v211 = vunpack.c.l.b16 %v79
    %v212 = vunpack.c.l.b16 %v80
    %v213 = vpack.c.b16 %v198, %v197
    %v214 = vpack.c.b16 %v200, %v199
    %v215 = vpack.c.b16 %v202, %v201
    %v216 = vpack.c.b16 %v204, %v203
    %v217 = vpack.c.b16 %v206, %v205
    %v218 = vpack.c.b16 %v208, %v207
    %v219 = vpack.c.b16 %v210, %v209
    %v220 = vpack.c.b16 %v212, %v211
    %229 = vmatpush.bf16.msra.mxu0 %v220
    %230 = vmatpush.bf16.msra.mxu0 %v219
    %231 = vmatpush.bf16.msra.mxu0 %v218
    %232 = vmatpush.bf16.msra.mxu0 %v217
    %233 = vmatpush.bf16.msra.mxu0 %v216
    %234 = vmatpush.bf16.msra.mxu0 %v215
    %235 = vmatpush.bf16.msra.mxu0 %v214
    %236 = vmatpush.bf16.msra.mxu0 %v213
    %237 = vmatmul.bf16.gmra.mxu0 %v149
    %v238 = vpop.f32.mrf.mxu0
    %v239 = vadd.f32 %v83, %v238
    %v240 = vpop.f32.mrf.mxu0
    %v241 = vadd.f32 %v83, %v240
    %242 = vmatmul.bf16.gmra.mxu0 %v150
    %v243 = vpop.f32.mrf.mxu0
    %v244 = vadd.f32 %v83, %v243
    %v245 = vpop.f32.mrf.mxu0
    %v246 = vadd.f32 %v83, %v245
    %247 = vmatmul.bf16.gmra.mxu0 %v151
    %v248 = vpop.f32.mrf.mxu0
    %v249 = vadd.f32 %v83, %v248
    %v250 = vpop.f32.mrf.mxu0
    %v251 = vadd.f32 %v83, %v250
    %252 = vmatmul.bf16.gmra.mxu0 %v152
    %v253 = vpop.f32.mrf.mxu0
    %v254 = vadd.f32 %v83, %v253
    %v255 = vpop.f32.mrf.mxu0
    %v256 = vadd.f32 %v83, %v255
    %257 = vmatmul.bf16.gmra.mxu0 %v153
    %v258 = vpop.f32.mrf.mxu0
    %v259 = vadd.f32 %v83, %v258
    %v260 = vpop.f32.mrf.mxu0
    %v261 = vadd.f32 %v83, %v260
    %262 = vmatmul.bf16.gmra.mxu0 %v154
    %v263 = vpop.f32.mrf.mxu0
    %v264 = vadd.f32 %v83, %v263
    %v265 = vpop.f32.mrf.mxu0
    %v266 = vadd.f32 %v83, %v265
    %267 = vmatmul.bf16.gmra.mxu0 %v155
    %v268 = vpop.f32.mrf.mxu0
    %v269 = vadd.f32 %v83, %v268
    %v270 = vpop.f32.mrf.mxu0
    %v271 = vadd.f32 %v83, %v270
    %272 = vmatmul.bf16.gmra.mxu0 %v156
    %v273 = vpop.f32.mrf.mxu0
    %v274 = vadd.f32 %v83, %v273
    %v275 = vpop.f32.mrf.mxu0
    %v276 = vadd.f32 %v83, %v275
    %277 = vmatmul.bf16.gmra.mxu0 %v157
    %v278 = vpop.f32.mrf.mxu0
    %v279 = vadd.f32 %v83, %v278
    %v280 = vpop.f32.mrf.mxu0
    %v281 = vadd.f32 %v83, %v280
    %282 = vmatmul.bf16.gmra.mxu0 %v158
    %v283 = vpop.f32.mrf.mxu0
    %v284 = vadd.f32 %v83, %v283
    %v285 = vpop.f32.mrf.mxu0
    %v286 = vadd.f32 %v83, %v285
    %287 = vmatmul.bf16.gmra.mxu0 %v159
    %v288 = vpop.f32.mrf.mxu0
    %v289 = vadd.f32 %v83, %v288
    %v290 = vpop.f32.mrf.mxu0
    %v291 = vadd.f32 %v83, %v290
    %292 = vmatmul.bf16.gmra.mxu0 %v160
    %v293 = vpop.f32.mrf.mxu0
    %v294 = vadd.f32 %v83, %v293
    %v295 = vpop.f32.mrf.mxu0
    %v296 = vadd.f32 %v83, %v295
    %297 = vmatmul.bf16.gmra.mxu0 %v161
    %v298 = vpop.f32.mrf.mxu0
    %v299 = vadd.f32 %v83, %v298
    %v300 = vpop.f32.mrf.mxu0
    %v301 = vadd.f32 %v83, %v300
    %302 = vmatmul.bf16.gmra.mxu0 %v162
    %v303 = vpop.f32.mrf.mxu0
    %v304 = vadd.f32 %v83, %v303
    %v305 = vpop.f32.mrf.mxu0
    %v306 = vadd.f32 %v83, %v305
    %307 = vmatmul.bf16.gmra.mxu0 %v163
    %v308 = vpop.f32.mrf.mxu0
    %v309 = vadd.f32 %v83, %v308
    %v310 = vpop.f32.mrf.mxu0
    %v311 = vadd.f32 %v83, %v310
    %312 = vmatmul.bf16.gmra.mxu0 %v164
    %v313 = vpop.f32.mrf.mxu0
    %v314 = vadd.f32 %v83, %v313
    %v315 = vpop.f32.mrf.mxu0
    %v316 = vadd.f32 %v83, %v315
    %317 = vdwg.mxu0
    %vm318 = vcmp.gt.f32.partialorder %v239, 0.0
    %vm319 = vcmp.gt.f32.partialorder %v241, 0.0
    %vm320 = vcmp.gt.f32.partialorder %v244, 0.0
    %vm321 = vcmp.gt.f32.partialorder %v246, 0.0
    %vm322 = vcmp.gt.f32.partialorder %v249, 0.0
    %vm323 = vcmp.gt.f32.partialorder %v251, 0.0
    %vm324 = vcmp.gt.f32.partialorder %v254, 0.0
    %vm325 = vcmp.gt.f32.partialorder %v256, 0.0
    %vm326 = vcmp.gt.f32.partialorder %v259, 0.0
    %vm327 = vcmp.gt.f32.partialorder %v261, 0.0
    %vm328 = vcmp.gt.f32.partialorder %v264, 0.0
    %vm329 = vcmp.gt.f32.partialorder %v266, 0.0
    %vm330 = vcmp.gt.f32.partialorder %v269, 0.0
    %vm331 = vcmp.gt.f32.partialorder %v271, 0.0
    %vm332 = vcmp.gt.f32.partialorder %v274, 0.0
    %vm333 = vcmp.gt.f32.partialorder %v276, 0.0
    %vm334 = vcmp.gt.f32.partialorder %v279, 0.0
    %vm335 = vcmp.gt.f32.partialorder %v281, 0.0
    %vm336 = vcmp.gt.f32.partialorder %v284, 0.0
    %vm337 = vcmp.gt.f32.partialorder %v286, 0.0
    %vm338 = vcmp.gt.f32.partialorder %v289, 0.0
    %vm339 = vcmp.gt.f32.partialorder %v291, 0.0
    %vm340 = vcmp.gt.f32.partialorder %v294, 0.0
    %vm341 = vcmp.gt.f32.partialorder %v296, 0.0
    %vm342 = vcmp.gt.f32.partialorder %v299, 0.0
    %vm343 = vcmp.gt.f32.partialorder %v301, 0.0
    %vm344 = vcmp.gt.f32.partialorder %v304, 0.0
    %vm345 = vcmp.gt.f32.partialorder %v306, 0.0
    %vm346 = vcmp.gt.f32.partialorder %v309, 0.0
    %vm347 = vcmp.gt.f32.partialorder %v311, 0.0
    %vm348 = vcmp.gt.f32.partialorder %v314, 0.0
    %vm349 = vcmp.gt.f32.partialorder %v316, 0.0
    %v350 = vmul.f32 %v239, 0.2
    %v351 = vmul.f32 %v241, 0.2
    %v352 = vmul.f32 %v244, 0.2
    %v353 = vmul.f32 %v246, 0.2
    %v354 = vmul.f32 %v249, 0.2
    %v355 = vmul.f32 %v251, 0.2
    %v356 = vmul.f32 %v254, 0.2
    %v357 = vmul.f32 %v256, 0.2
    %v358 = vmul.f32 %v259, 0.2
    %v359 = vmul.f32 %v261, 0.2
    %v360 = vmul.f32 %v264, 0.2
    %v361 = vmul.f32 %v266, 0.2
    %v362 = vmul.f32 %v269, 0.2
    %v363 = vmul.f32 %v271, 0.2
    %v364 = vmul.f32 %v274, 0.2
    %v365 = vmul.f32 %v276, 0.2
    %v366 = vmul.f32 %v279, 0.2
    %v367 = vmul.f32 %v281, 0.2
    %v368 = vmul.f32 %v284, 0.2
    %v369 = vmul.f32 %v286, 0.2
    %v370 = vmul.f32 %v289, 0.2
    %v371 = vmul.f32 %v291, 0.2
    %v372 = vmul.f32 %v294, 0.2
    %v373 = vmul.f32 %v296, 0.2
    %v374 = vmul.f32 %v299, 0.2
    %v375 = vmul.f32 %v301, 0.2
    %v376 = vmul.f32 %v304, 0.2
    %v377 = vmul.f32 %v306, 0.2
    %v378 = vmul.f32 %v309, 0.2
    %v379 = vmul.f32 %v311, 0.2
    %v380 = vmul.f32 %v314, 0.2
    %v381 = vmul.f32 %v316, 0.2
    %v382 = vsel %vm318, %v239, %v350
    %v383 = vsel %vm319, %v241, %v351
    %v384 = vsel %vm320, %v244, %v352
    %v385 = vsel %vm321, %v246, %v353
    %v386 = vsel %vm322, %v249, %v354
    %v387 = vsel %vm323, %v251, %v355
    %v388 = vsel %vm324, %v254, %v356
    %v389 = vsel %vm325, %v256, %v357
    %v390 = vsel %vm326, %v259, %v358
    %v391 = vsel %vm327, %v261, %v359
    %v392 = vsel %vm328, %v264, %v360
    %v393 = vsel %vm329, %v266, %v361
    %v394 = vsel %vm330, %v269, %v362
    %v395 = vsel %vm331, %v271, %v363
    %v396 = vsel %vm332, %v274, %v364
    %v397 = vsel %vm333, %v276, %v365
    %v398 = vsel %vm334, %v279, %v366
    %v399 = vsel %vm335, %v281, %v367
    %v400 = vsel %vm336, %v284, %v368
    %v401 = vsel %vm337, %v286, %v369
    %v402 = vsel %vm338, %v289, %v370
    %v403 = vsel %vm339, %v291, %v371
    %v404 = vsel %vm340, %v294, %v372
    %v405 = vsel %vm341, %v296, %v373
    %v406 = vsel %vm342, %v299, %v374
    %v407 = vsel %vm343, %v301, %v375
    %v408 = vsel %vm344, %v304, %v376
    %v409 = vsel %vm345, %v306, %v377
    %v410 = vsel %vm346, %v309, %v378
    %v411 = vsel %vm347, %v311, %v379
    %v412 = vsel %vm348, %v314, %v380
    %v413 = vsel %vm349, %v316, %v381
    %v414 = vpack.c.bf16 %v383, %v382
    %v415 = vpack.c.bf16 %v385, %v384
    %v416 = vpack.c.bf16 %v387, %v386
    %v417 = vpack.c.bf16 %v389, %v388
    %v418 = vpack.c.bf16 %v391, %v390
    %v419 = vpack.c.bf16 %v393, %v392
    %v420 = vpack.c.bf16 %v395, %v394
    %v421 = vpack.c.bf16 %v397, %v396
    %v422 = vpack.c.bf16 %v399, %v398
    %v423 = vpack.c.bf16 %v401, %v400
    %v424 = vpack.c.bf16 %v403, %v402
    %v425 = vpack.c.bf16 %v405, %v404
    %v426 = vpack.c.bf16 %v407, %v406
    %v427 = vpack.c.bf16 %v409, %v408
    %v428 = vpack.c.bf16 %v411, %v410
    %v429 = vpack.c.bf16 %v413, %v412
    %v430 = vld [vmem:[%s3] sm:$0xf]
    %v431 = vld [vmem:[%s3 + $0x4] sm:$0xf]
    %v432 = vld [vmem:[%s3 + $0x8] sm:$0xf]
    %v433 = vld [vmem:[%s3 + $0xc] sm:$0xf]
    %v434 = vld [vmem:[%s3 + $0x10] sm:$0xf]
    %v435 = vld [vmem:[%s3 + $0x14] sm:$0xf]
    %v436 = vld [vmem:[%s3 + $0x18] sm:$0xf]
    %v437 = vld [vmem:[%s3 + $0x1c] sm:$0xf]
    %v438 = vld [vmem:[%s3 + $0x20] sm:$0xf]
    %v439 = vld [vmem:[%s3 + $0x24] sm:$0xf]
    %v440 = vld [vmem:[%s3 + $0x28] sm:$0xf]
    %v441 = vld [vmem:[%s3 + $0x2c] sm:$0xf]
    %v442 = vld [vmem:[%s3 + $0x30] sm:$0xf]
    %v443 = vld [vmem:[%s3 + $0x34] sm:$0xf]
    %v444 = vld [vmem:[%s3 + $0x38] sm:$0xf]
    %v445 = vld [vmem:[%s3 + $0x3c] sm:$0xf]
    %v446 = vld [vmem:[%s4] sm:$0x1]
    %v448 = vperm.slane %v446, 0
    %v466 = vunpack.c.l.b16 %v430
    %v467 = vunpack.c.l.b16 %v431
    %v468 = vunpack.c.l.b16 %v432
    %v469 = vunpack.c.l.b16 %v433
    %v470 = vunpack.c.l.b16 %v434
    %v471 = vunpack.c.l.b16 %v435
    %v472 = vunpack.c.l.b16 %v436
    %v473 = vunpack.c.l.b16 %v437
    %v474 = vunpack.c.l.b16 %v438
    %v475 = vunpack.c.l.b16 %v439
    %v476 = vunpack.c.l.b16 %v440
    %v477 = vunpack.c.l.b16 %v441
    %v478 = vunpack.c.l.b16 %v442
    %v479 = vunpack.c.l.b16 %v443
    %v480 = vunpack.c.l.b16 %v444
    %v481 = vunpack.c.l.b16 %v445
    %v482 = vpack.c.b16 %v467, %v466
    %v483 = vpack.c.b16 %v469, %v468
    %v484 = vpack.c.b16 %v471, %v470
    %v485 = vpack.c.b16 %v473, %v472
    %v486 = vpack.c.b16 %v475, %v474
    %v487 = vpack.c.b16 %v477, %v476
    %v488 = vpack.c.b16 %v479, %v478
    %v489 = vpack.c.b16 %v481, %v480
    %498 = vmatpush.bf16.msra.mxu0 %v489
    %499 = vmatpush.bf16.msra.mxu0 %v488
    %500 = vmatpush.bf16.msra.mxu0 %v487
    %501 = vmatpush.bf16.msra.mxu0 %v486
    %502 = vmatpush.bf16.msra.mxu0 %v485
    %503 = vmatpush.bf16.msra.mxu0 %v484
    %504 = vmatpush.bf16.msra.mxu0 %v483
    %505 = vmatpush.bf16.msra.mxu0 %v482
    %506 = vmatmul.bf16.gmra.mxu0 %v414
    %v507 = vpop.f32.mrf.mxu0
    %v508 = vadd.f32 %v448, %v507
    %v509 = vpop.f32.mrf.mxu0
    %v510 = vadd.f32 %v448, %v509
    %511 = vmatmul.bf16.gmra.mxu0 %v415
    %v512 = vpop.f32.mrf.mxu0
    %v513 = vadd.f32 %v448, %v512
    %v514 = vpop.f32.mrf.mxu0
    %v515 = vadd.f32 %v448, %v514
    %516 = vmatmul.bf16.gmra.mxu0 %v416
    %v517 = vpop.f32.mrf.mxu0
    %v518 = vadd.f32 %v448, %v517
    %v519 = vpop.f32.mrf.mxu0
    %v520 = vadd.f32 %v448, %v519
    %521 = vmatmul.bf16.gmra.mxu0 %v417
    %v522 = vpop.f32.mrf.mxu0
    %v523 = vadd.f32 %v448, %v522
    %v524 = vpop.f32.mrf.mxu0
    %v525 = vadd.f32 %v448, %v524
    %526 = vmatmul.bf16.gmra.mxu0 %v418
    %v527 = vpop.f32.mrf.mxu0
    %v528 = vadd.f32 %v448, %v527
    %v529 = vpop.f32.mrf.mxu0
    %v530 = vadd.f32 %v448, %v529
    %531 = vmatmul.bf16.gmra.mxu0 %v419
    %v532 = vpop.f32.mrf.mxu0
    %v533 = vadd.f32 %v448, %v532
    %v534 = vpop.f32.mrf.mxu0
    %v535 = vadd.f32 %v448, %v534
    %536 = vmatmul.bf16.gmra.mxu0 %v420
    %v537 = vpop.f32.mrf.mxu0
    %v538 = vadd.f32 %v448, %v537
    %v539 = vpop.f32.mrf.mxu0
    %v540 = vadd.f32 %v448, %v539
    %541 = vmatmul.bf16.gmra.mxu0 %v421
    %v542 = vpop.f32.mrf.mxu0
    %v543 = vadd.f32 %v448, %v542
    %v544 = vpop.f32.mrf.mxu0
    %v545 = vadd.f32 %v448, %v544
    %546 = vmatmul.bf16.gmra.mxu0 %v422
    %v547 = vpop.f32.mrf.mxu0
    %v548 = vadd.f32 %v448, %v547
    %v549 = vpop.f32.mrf.mxu0
    %v550 = vadd.f32 %v448, %v549
    %551 = vmatmul.bf16.gmra.mxu0 %v423
    %v552 = vpop.f32.mrf.mxu0
    %v553 = vadd.f32 %v448, %v552
    %v554 = vpop.f32.mrf.mxu0
    %v555 = vadd.f32 %v448, %v554
    %556 = vmatmul.bf16.gmra.mxu0 %v424
    %v557 = vpop.f32.mrf.mxu0
    %v558 = vadd.f32 %v448, %v557
    %v559 = vpop.f32.mrf.mxu0
    %v560 = vadd.f32 %v448, %v559
    %561 = vmatmul.bf16.gmra.mxu0 %v425
    %v562 = vpop.f32.mrf.mxu0
    %v563 = vadd.f32 %v448, %v562
    %v564 = vpop.f32.mrf.mxu0
    %v565 = vadd.f32 %v448, %v564
    %566 = vmatmul.bf16.gmra.mxu0 %v426
    %v567 = vpop.f32.mrf.mxu0
    %v568 = vadd.f32 %v448, %v567
    %v569 = vpop.f32.mrf.mxu0
    %v570 = vadd.f32 %v448, %v569
    %571 = vmatmul.bf16.gmra.mxu0 %v427
    %v572 = vpop.f32.mrf.mxu0
    %v573 = vadd.f32 %v448, %v572
    %v574 = vpop.f32.mrf.mxu0
    %v575 = vadd.f32 %v448, %v574
    %576 = vmatmul.bf16.gmra.mxu0 %v428
    %v577 = vpop.f32.mrf.mxu0
    %v578 = vadd.f32 %v448, %v577
    %v579 = vpop.f32.mrf.mxu0
    %v580 = vadd.f32 %v448, %v579
    %581 = vmatmul.bf16.gmra.mxu0 %v429
    %v582 = vpop.f32.mrf.mxu0
    %v583 = vadd.f32 %v448, %v582
    %v584 = vpop.f32.mrf.mxu0
    %v585 = vadd.f32 %v448, %v584
    %586 = vdwg.mxu0
    %vm587 = vcmp.gt.f32.partialorder %v508, 0.0
    %vm588 = vcmp.gt.f32.partialorder %v510, 0.0
    %vm589 = vcmp.gt.f32.partialorder %v513, 0.0
    %vm590 = vcmp.gt.f32.partialorder %v515, 0.0
    %vm591 = vcmp.gt.f32.partialorder %v518, 0.0
    %vm592 = vcmp.gt.f32.partialorder %v520, 0.0
    %vm593 = vcmp.gt.f32.partialorder %v523, 0.0
    %vm594 = vcmp.gt.f32.partialorder %v525, 0.0
    %vm595 = vcmp.gt.f32.partialorder %v528, 0.0
    %vm596 = vcmp.gt.f32.partialorder %v530, 0.0
    %vm597 = vcmp.gt.f32.partialorder %v533, 0.0
    %vm598 = vcmp.gt.f32.partialorder %v535, 0.0
    %vm599 = vcmp.gt.f32.partialorder %v538, 0.0
    %vm600 = vcmp.gt.f32.partialorder %v540, 0.0
    %vm601 = vcmp.gt.f32.partialorder %v543, 0.0
    %vm602 = vcmp.gt.f32.partialorder %v545, 0.0
    %vm603 = vcmp.gt.f32.partialorder %v548, 0.0
    %vm604 = vcmp.gt.f32.partialorder %v550, 0.0
    %vm605 = vcmp.gt.f32.partialorder %v553, 0.0
    %vm606 = vcmp.gt.f32.partialorder %v555, 0.0
    %vm607 = vcmp.gt.f32.partialorder %v558, 0.0
    %vm608 = vcmp.gt.f32.partialorder %v560, 0.0
    %vm609 = vcmp.gt.f32.partialorder %v563, 0.0
    %vm610 = vcmp.gt.f32.partialorder %v565, 0.0
    %vm611 = vcmp.gt.f32.partialorder %v568, 0.0
    %vm612 = vcmp.gt.f32.partialorder %v570, 0.0
    %vm613 = vcmp.gt.f32.partialorder %v573, 0.0
    %vm614 = vcmp.gt.f32.partialorder %v575, 0.0
    %vm615 = vcmp.gt.f32.partialorder %v578, 0.0
    %vm616 = vcmp.gt.f32.partialorder %v580, 0.0
    %vm617 = vcmp.gt.f32.partialorder %v583, 0.0
    %vm618 = vcmp.gt.f32.partialorder %v585, 0.0
    %v619 = vmul.f32 %v508, 0.2
    %v620 = vmul.f32 %v510, 0.2
    %v621 = vmul.f32 %v513, 0.2
    %v622 = vmul.f32 %v515, 0.2
    %v623 = vmul.f32 %v518, 0.2
    %v624 = vmul.f32 %v520, 0.2
    %v625 = vmul.f32 %v523, 0.2
    %v626 = vmul.f32 %v525, 0.2
    %v627 = vmul.f32 %v528, 0.2
    %v628 = vmul.f32 %v530, 0.2
    %v629 = vmul.f32 %v533, 0.2
    %v630 = vmul.f32 %v535, 0.2
    %v631 = vmul.f32 %v538, 0.2
    %v632 = vmul.f32 %v540, 0.2
    %v633 = vmul.f32 %v543, 0.2
    %v634 = vmul.f32 %v545, 0.2
    %v635 = vmul.f32 %v548, 0.2
    %v636 = vmul.f32 %v550, 0.2
    %v637 = vmul.f32 %v553, 0.2
    %v638 = vmul.f32 %v555, 0.2
    %v639 = vmul.f32 %v558, 0.2
    %v640 = vmul.f32 %v560, 0.2
    %v641 = vmul.f32 %v563, 0.2
    %v642 = vmul.f32 %v565, 0.2
    %v643 = vmul.f32 %v568, 0.2
    %v644 = vmul.f32 %v570, 0.2
    %v645 = vmul.f32 %v573, 0.2
    %v646 = vmul.f32 %v575, 0.2
    %v647 = vmul.f32 %v578, 0.2
    %v648 = vmul.f32 %v580, 0.2
    %v649 = vmul.f32 %v583, 0.2
    %v650 = vmul.f32 %v585, 0.2
    %v651 = vsel %vm587, %v508, %v619
    %v652 = vsel %vm588, %v510, %v620
    %v653 = vsel %vm589, %v513, %v621
    %v654 = vsel %vm590, %v515, %v622
    %v655 = vsel %vm591, %v518, %v623
    %v656 = vsel %vm592, %v520, %v624
    %v657 = vsel %vm593, %v523, %v625
    %v658 = vsel %vm594, %v525, %v626
    %v659 = vsel %vm595, %v528, %v627
    %v660 = vsel %vm596, %v530, %v628
    %v661 = vsel %vm597, %v533, %v629
    %v662 = vsel %vm598, %v535, %v630
    %v663 = vsel %vm599, %v538, %v631
    %v664 = vsel %vm600, %v540, %v632
    %v665 = vsel %vm601, %v543, %v633
    %v666 = vsel %vm602, %v545, %v634
    %v667 = vsel %vm603, %v548, %v635
    %v668 = vsel %vm604, %v550, %v636
    %v669 = vsel %vm605, %v553, %v637
    %v670 = vsel %vm606, %v555, %v638
    %v671 = vsel %vm607, %v558, %v639
    %v672 = vsel %vm608, %v560, %v640
    %v673 = vsel %vm609, %v563, %v641
    %v674 = vsel %vm610, %v565, %v642
    %v675 = vsel %vm611, %v568, %v643
    %v676 = vsel %vm612, %v570, %v644
    %v677 = vsel %vm613, %v573, %v645
    %v678 = vsel %vm614, %v575, %v646
    %v679 = vsel %vm615, %v578, %v647
    %v680 = vsel %vm616, %v580, %v648
    %v681 = vsel %vm617, %v583, %v649
    %v682 = vsel %vm618, %v585, %v650
    %v683 = vpack.c.bf16 %v652, %v651
    %v684 = vpack.c.bf16 %v654, %v653
    %v685 = vpack.c.bf16 %v656, %v655
    %v686 = vpack.c.bf16 %v658, %v657
    %v687 = vpack.c.bf16 %v660, %v659
    %v688 = vpack.c.bf16 %v662, %v661
    %v689 = vpack.c.bf16 %v664, %v663
    %v690 = vpack.c.bf16 %v666, %v665
    %v691 = vpack.c.bf16 %v668, %v667
    %v692 = vpack.c.bf16 %v670, %v669
    %v693 = vpack.c.bf16 %v672, %v671
    %v694 = vpack.c.bf16 %v674, %v673
    %v695 = vpack.c.bf16 %v676, %v675
    %v696 = vpack.c.bf16 %v678, %v677
    %v697 = vpack.c.bf16 %v680, %v679
    %v698 = vpack.c.bf16 %v682, %v681
    %v699 = vld [vmem:[%s5] sm:$0xf]
    %v700 = vld [vmem:[%s5 + $0x4] sm:$0xf]
    %v701 = vld [vmem:[%s5 + $0x8] sm:$0xf]
    %v702 = vld [vmem:[%s5 + $0xc] sm:$0xf]
    %v703 = vld [vmem:[%s5 + $0x10] sm:$0xf]
    %v704 = vld [vmem:[%s5 + $0x14] sm:$0xf]
    %v705 = vld [vmem:[%s5 + $0x18] sm:$0xf]
    %v706 = vld [vmem:[%s5 + $0x1c] sm:$0xf]
    %v707 = vld [vmem:[%s5 + $0x20] sm:$0xf]
    %v708 = vld [vmem:[%s5 + $0x24] sm:$0xf]
    %v709 = vld [vmem:[%s5 + $0x28] sm:$0xf]
    %v710 = vld [vmem:[%s5 + $0x2c] sm:$0xf]
    %v711 = vld [vmem:[%s5 + $0x30] sm:$0xf]
    %v712 = vld [vmem:[%s5 + $0x34] sm:$0xf]
    %v713 = vld [vmem:[%s5 + $0x38] sm:$0xf]
    %v714 = vld [vmem:[%s5 + $0x3c] sm:$0xf]
    %v715 = vld [vmem:[%s6] sm:$0x1]
    %v717 = vperm.slane %v715, 0
    %v735 = vunpack.c.l.b16 %v699
    %v736 = vunpack.c.l.b16 %v700
    %v737 = vunpack.c.l.b16 %v701
    %v738 = vunpack.c.l.b16 %v702
    %v739 = vunpack.c.l.b16 %v703
    %v740 = vunpack.c.l.b16 %v704
    %v741 = vunpack.c.l.b16 %v705
    %v742 = vunpack.c.l.b16 %v706
    %v743 = vunpack.c.l.b16 %v707
    %v744 = vunpack.c.l.b16 %v708
    %v745 = vunpack.c.l.b16 %v709
    %v746 = vunpack.c.l.b16 %v710
    %v747 = vunpack.c.l.b16 %v711
    %v748 = vunpack.c.l.b16 %v712
    %v749 = vunpack.c.l.b16 %v713
    %v750 = vunpack.c.l.b16 %v714
    %v751 = vpack.c.b16 %v736, %v735
    %v752 = vpack.c.b16 %v738, %v737
    %v753 = vpack.c.b16 %v740, %v739
    %v754 = vpack.c.b16 %v742, %v741
    %v755 = vpack.c.b16 %v744, %v743
    %v756 = vpack.c.b16 %v746, %v745
    %v757 = vpack.c.b16 %v748, %v747
    %v758 = vpack.c.b16 %v750, %v749
    %767 = vmatpush.bf16.msra.mxu0 %v758
    %768 = vmatpush.bf16.msra.mxu0 %v757
    %769 = vmatpush.bf16.msra.mxu0 %v756
    %770 = vmatpush.bf16.msra.mxu0 %v755
    %771 = vmatpush.bf16.msra.mxu0 %v754
    %772 = vmatpush.bf16.msra.mxu0 %v753
    %773 = vmatpush.bf16.msra.mxu0 %v752
    %774 = vmatpush.bf16.msra.mxu0 %v751
    %775 = vmatmul.bf16.gmra.mxu0 %v683
    %v776 = vpop.f32.mrf.mxu0
    %v777 = vadd.f32 %v717, %v776
    %v778 = vpop.f32.mrf.mxu0
    %v779 = vadd.f32 %v717, %v778
    %780 = vmatmul.bf16.gmra.mxu0 %v684
    %v781 = vpop.f32.mrf.mxu0
    %v782 = vadd.f32 %v717, %v781
    %v783 = vpop.f32.mrf.mxu0
    %v784 = vadd.f32 %v717, %v783
    %785 = vmatmul.bf16.gmra.mxu0 %v685
    %v786 = vpop.f32.mrf.mxu0
    %v787 = vadd.f32 %v717, %v786
    %v788 = vpop.f32.mrf.mxu0
    %v789 = vadd.f32 %v717, %v788
    %790 = vmatmul.bf16.gmra.mxu0 %v686
    %v791 = vpop.f32.mrf.mxu0
    %v792 = vadd.f32 %v717, %v791
    %v793 = vpop.f32.mrf.mxu0
    %v794 = vadd.f32 %v717, %v793
    %795 = vmatmul.bf16.gmra.mxu0 %v687
    %v796 = vpop.f32.mrf.mxu0
    %v797 = vadd.f32 %v717, %v796
    %v798 = vpop.f32.mrf.mxu0
    %v799 = vadd.f32 %v717, %v798
    %800 = vmatmul.bf16.gmra.mxu0 %v688
    %v801 = vpop.f32.mrf.mxu0
    %v802 = vadd.f32 %v717, %v801
    %v803 = vpop.f32.mrf.mxu0
    %v804 = vadd.f32 %v717, %v803
    %805 = vmatmul.bf16.gmra.mxu0 %v689
    %v806 = vpop.f32.mrf.mxu0
    %v807 = vadd.f32 %v717, %v806
    %v808 = vpop.f32.mrf.mxu0
    %v809 = vadd.f32 %v717, %v808
    %810 = vmatmul.bf16.gmra.mxu0 %v690
    %v811 = vpop.f32.mrf.mxu0
    %v812 = vadd.f32 %v717, %v811
    %v813 = vpop.f32.mrf.mxu0
    %v814 = vadd.f32 %v717, %v813
    %815 = vmatmul.bf16.gmra.mxu0 %v691
    %v816 = vpop.f32.mrf.mxu0
    %v817 = vadd.f32 %v717, %v816
    %v818 = vpop.f32.mrf.mxu0
    %v819 = vadd.f32 %v717, %v818
    %820 = vmatmul.bf16.gmra.mxu0 %v692
    %v821 = vpop.f32.mrf.mxu0
    %v822 = vadd.f32 %v717, %v821
    %v823 = vpop.f32.mrf.mxu0
    %v824 = vadd.f32 %v717, %v823
    %825 = vmatmul.bf16.gmra.mxu0 %v693
    %v826 = vpop.f32.mrf.mxu0
    %v827 = vadd.f32 %v717, %v826
    %v828 = vpop.f32.mrf.mxu0
    %v829 = vadd.f32 %v717, %v828
    %830 = vmatmul.bf16.gmra.mxu0 %v694
    %v831 = vpop.f32.mrf.mxu0
    %v832 = vadd.f32 %v717, %v831
    %v833 = vpop.f32.mrf.mxu0
    %v834 = vadd.f32 %v717, %v833
    %835 = vmatmul.bf16.gmra.mxu0 %v695
    %v836 = vpop.f32.mrf.mxu0
    %v837 = vadd.f32 %v717, %v836
    %v838 = vpop.f32.mrf.mxu0
    %v839 = vadd.f32 %v717, %v838
    %840 = vmatmul.bf16.gmra.mxu0 %v696
    %v841 = vpop.f32.mrf.mxu0
    %v842 = vadd.f32 %v717, %v841
    %v843 = vpop.f32.mrf.mxu0
    %v844 = vadd.f32 %v717, %v843
    %845 = vmatmul.bf16.gmra.mxu0 %v697
    %v846 = vpop.f32.mrf.mxu0
    %v847 = vadd.f32 %v717, %v846
    %v848 = vpop.f32.mrf.mxu0
    %v849 = vadd.f32 %v717, %v848
    %850 = vmatmul.bf16.gmra.mxu0 %v698
    %v851 = vpop.f32.mrf.mxu0
    %v852 = vadd.f32 %v717, %v851
    %v853 = vpop.f32.mrf.mxu0
    %v854 = vadd.f32 %v717, %v853
    %855 = vdwg.mxu0
    %vm856 = vcmp.gt.f32.partialorder %v777, 0.0
    %vm857 = vcmp.gt.f32.partialorder %v779, 0.0
    %vm858 = vcmp.gt.f32.partialorder %v782, 0.0
    %vm859 = vcmp.gt.f32.partialorder %v784, 0.0
    %vm860 = vcmp.gt.f32.partialorder %v787, 0.0
    %vm861 = vcmp.gt.f32.partialorder %v789, 0.0
    %vm862 = vcmp.gt.f32.partialorder %v792, 0.0
    %vm863 = vcmp.gt.f32.partialorder %v794, 0.0
    %vm864 = vcmp.gt.f32.partialorder %v797, 0.0
    %vm865 = vcmp.gt.f32.partialorder %v799, 0.0
    %vm866 = vcmp.gt.f32.partialorder %v802, 0.0
    %vm867 = vcmp.gt.f32.partialorder %v804, 0.0
    %vm868 = vcmp.gt.f32.partialorder %v807, 0.0
    %vm869 = vcmp.gt.f32.partialorder %v809, 0.0
    %vm870 = vcmp.gt.f32.partialorder %v812, 0.0
    %vm871 = vcmp.gt.f32.partialorder %v814, 0.0
    %vm872 = vcmp.gt.f32.partialorder %v817, 0.0
    %vm873 = vcmp.gt.f32.partialorder %v819, 0.0
    %vm874 = vcmp.gt.f32.partialorder %v822, 0.0
    %vm875 = vcmp.gt.f32.partialorder %v824, 0.0
    %vm876 = vcmp.gt.f32.partialorder %v827, 0.0
    %vm877 = vcmp.gt.f32.partialorder %v829, 0.0
    %vm878 = vcmp.gt.f32.partialorder %v832, 0.0
    %vm879 = vcmp.gt.f32.partialorder %v834, 0.0
    %vm880 = vcmp.gt.f32.partialorder %v837, 0.0
    %vm881 = vcmp.gt.f32.partialorder %v839, 0.0
    %vm882 = vcmp.gt.f32.partialorder %v842, 0.0
    %vm883 = vcmp.gt.f32.partialorder %v844, 0.0
    %vm884 = vcmp.gt.f32.partialorder %v847, 0.0
    %vm885 = vcmp.gt.f32.partialorder %v849, 0.0
    %vm886 = vcmp.gt.f32.partialorder %v852, 0.0
    %vm887 = vcmp.gt.f32.partialorder %v854, 0.0
    %v888 = vmul.f32 %v777, 0.2
    %v889 = vmul.f32 %v779, 0.2
    %v890 = vmul.f32 %v782, 0.2
    %v891 = vmul.f32 %v784, 0.2
    %v892 = vmul.f32 %v787, 0.2
    %v893 = vmul.f32 %v789, 0.2
    %v894 = vmul.f32 %v792, 0.2
    %v895 = vmul.f32 %v794, 0.2
    %v896 = vmul.f32 %v797, 0.2
    %v897 = vmul.f32 %v799, 0.2
    %v898 = vmul.f32 %v802, 0.2
    %v899 = vmul.f32 %v804, 0.2
    %v900 = vmul.f32 %v807, 0.2
    %v901 = vmul.f32 %v809, 0.2
    %v902 = vmul.f32 %v812, 0.2
    %v903 = vmul.f32 %v814, 0.2
    %v904 = vmul.f32 %v817, 0.2
    %v905 = vmul.f32 %v819, 0.2
    %v906 = vmul.f32 %v822, 0.2
    %v907 = vmul.f32 %v824, 0.2
    %v908 = vmul.f32 %v827, 0.2
    %v909 = vmul.f32 %v829, 0.2
    %v910 = vmul.f32 %v832, 0.2
    %v911 = vmul.f32 %v834, 0.2
    %v912 = vmul.f32 %v837, 0.2
    %v913 = vmul.f32 %v839, 0.2
    %v914 = vmul.f32 %v842, 0.2
    %v915 = vmul.f32 %v844, 0.2
    %v916 = vmul.f32 %v847, 0.2
    %v917 = vmul.f32 %v849, 0.2
    %v918 = vmul.f32 %v852, 0.2
    %v919 = vmul.f32 %v854, 0.2
    %v920 = vsel %vm856, %v777, %v888
    %v921 = vsel %vm857, %v779, %v889
    %v922 = vsel %vm858, %v782, %v890
    %v923 = vsel %vm859, %v784, %v891
    %v924 = vsel %vm860, %v787, %v892
    %v925 = vsel %vm861, %v789, %v893
    %v926 = vsel %vm862, %v792, %v894
    %v927 = vsel %vm863, %v794, %v895
    %v928 = vsel %vm864, %v797, %v896
    %v929 = vsel %vm865, %v799, %v897
    %v930 = vsel %vm866, %v802, %v898
    %v931 = vsel %vm867, %v804, %v899
    %v932 = vsel %vm868, %v807, %v900
    %v933 = vsel %vm869, %v809, %v901
    %v934 = vsel %vm870, %v812, %v902
    %v935 = vsel %vm871, %v814, %v903
    %v936 = vsel %vm872, %v817, %v904
    %v937 = vsel %vm873, %v819, %v905
    %v938 = vsel %vm874, %v822, %v906
    %v939 = vsel %vm875, %v824, %v907
    %v940 = vsel %vm876, %v827, %v908
    %v941 = vsel %vm877, %v829, %v909
    %v942 = vsel %vm878, %v832, %v910
    %v943 = vsel %vm879, %v834, %v911
    %v944 = vsel %vm880, %v837, %v912
    %v945 = vsel %vm881, %v839, %v913
    %v946 = vsel %vm882, %v842, %v914
    %v947 = vsel %vm883, %v844, %v915
    %v948 = vsel %vm884, %v847, %v916
    %v949 = vsel %vm885, %v849, %v917
    %v950 = vsel %vm886, %v852, %v918
    %v951 = vsel %vm887, %v854, %v919
    %v952 = vpack.c.bf16 %v921, %v920
    %v953 = vpack.c.bf16 %v923, %v922
    %v954 = vpack.c.bf16 %v925, %v924
    %v955 = vpack.c.bf16 %v927, %v926
    %v956 = vpack.c.bf16 %v929, %v928
    %v957 = vpack.c.bf16 %v931, %v930
    %v958 = vpack.c.bf16 %v933, %v932
    %v959 = vpack.c.bf16 %v935, %v934
    %v960 = vpack.c.bf16 %v937, %v936
    %v961 = vpack.c.bf16 %v939, %v938
    %v962 = vpack.c.bf16 %v941, %v940
    %v963 = vpack.c.bf16 %v943, %v942
    %v964 = vpack.c.bf16 %v945, %v944
    %v965 = vpack.c.bf16 %v947, %v946
    %v966 = vpack.c.bf16 %v949, %v948
    %v967 = vpack.c.bf16 %v951, %v950
    %v968 = vld [vmem:[%s7] sm:$0xff]
    %v969 = vld [vmem:[%s7 + $0x8] sm:$0xff]
    %v970 = vld [vmem:[%s7 + $0x10] sm:$0xff]
    %v971 = vld [vmem:[%s7 + $0x18] sm:$0xff]
    %v972 = vld [vmem:[%s7 + $0x20] sm:$0xff]
    %v973 = vld [vmem:[%s7 + $0x28] sm:$0xff]
    %v974 = vld [vmem:[%s7 + $0x30] sm:$0xff]
    %v975 = vld [vmem:[%s7 + $0x38] sm:$0xff]
    %v976 = vld [vmem:[%s7 + $0x40] sm:$0xff]
    %v977 = vld [vmem:[%s7 + $0x48] sm:$0xff]
    %v978 = vld [vmem:[%s7 + $0x50] sm:$0xff]
    %v979 = vld [vmem:[%s7 + $0x58] sm:$0xff]
    %v980 = vld [vmem:[%s7 + $0x60] sm:$0xff]
    %v981 = vld [vmem:[%s7 + $0x68] sm:$0xff]
    %v982 = vld [vmem:[%s7 + $0x70] sm:$0xff]
    %v983 = vld [vmem:[%s7 + $0x78] sm:$0xff]
    %v984 = vld [vmem:[%s8] sm:$0x3]
    %v986 = vperm.slane %v984, 0
    %v987 = vperm.slane %v984, 1
    %v1006 = vunpack.c.l.b16 %v968
    %v1007 = vunpack.c.h.b16 %v968
    %v1008 = vunpack.c.l.b16 %v969
    %v1009 = vunpack.c.h.b16 %v969
    %v1010 = vunpack.c.l.b16 %v970
    %v1011 = vunpack.c.h.b16 %v970
    %v1012 = vunpack.c.l.b16 %v971
    %v1013 = vunpack.c.h.b16 %v971
    %v1014 = vunpack.c.l.b16 %v972
    %v1015 = vunpack.c.h.b16 %v972
    %v1016 = vunpack.c.l.b16 %v973
    %v1017 = vunpack.c.h.b16 %v973
    %v1018 = vunpack.c.l.b16 %v974
    %v1019 = vunpack.c.h.b16 %v974
    %v1020 = vunpack.c.l.b16 %v975
    %v1021 = vunpack.c.h.b16 %v975
    %v1022 = vunpack.c.l.b16 %v976
    %v1023 = vunpack.c.h.b16 %v976
    %v1024 = vunpack.c.l.b16 %v977
    %v1025 = vunpack.c.h.b16 %v977
    %v1026 = vunpack.c.l.b16 %v978
    %v1027 = vunpack.c.h.b16 %v978
    %v1028 = vunpack.c.l.b16 %v979
    %v1029 = vunpack.c.h.b16 %v979
    %v1030 = vunpack.c.l.b16 %v980
    %v1031 = vunpack.c.h.b16 %v980
    %v1032 = vunpack.c.l.b16 %v981
    %v1033 = vunpack.c.h.b16 %v981
    %v1034 = vunpack.c.l.b16 %v982
    %v1035 = vunpack.c.h.b16 %v982
    %v1036 = vunpack.c.l.b16 %v983
    %v1037 = vunpack.c.h.b16 %v983
    %v1038 = vpack.c.b16 %v1008, %v1006
    %v1039 = vpack.c.b16 %v1009, %v1007
    %v1040 = vpack.c.b16 %v1012, %v1010
    %v1041 = vpack.c.b16 %v1013, %v1011
    %v1042 = vpack.c.b16 %v1016, %v1014
    %v1043 = vpack.c.b16 %v1017, %v1015
    %v1044 = vpack.c.b16 %v1020, %v1018
    %v1045 = vpack.c.b16 %v1021, %v1019
    %v1046 = vpack.c.b16 %v1024, %v1022
    %v1047 = vpack.c.b16 %v1025, %v1023
    %v1048 = vpack.c.b16 %v1028, %v1026
    %v1049 = vpack.c.b16 %v1029, %v1027
    %v1050 = vpack.c.b16 %v1032, %v1030
    %v1051 = vpack.c.b16 %v1033, %v1031
    %v1052 = vpack.c.b16 %v1036, %v1034
    %v1053 = vpack.c.b16 %v1037, %v1035
    %1070 = vmatpush.bf16.msra.mxu0 %v1052
    %1071 = vmatpush.bf16.msra.mxu0 %v1050
    %1072 = vmatpush.bf16.msra.mxu0 %v1048
    %1073 = vmatpush.bf16.msra.mxu0 %v1046
    %1074 = vmatpush.bf16.msra.mxu0 %v1044
    %1075 = vmatpush.bf16.msra.mxu0 %v1042
    %1076 = vmatpush.bf16.msra.mxu0 %v1040
    %1077 = vmatpush.bf16.msra.mxu0 %v1038
    %1078 = vmatmul.bf16.gmra.mxu0 %v952
    %v1079 = vpop.f32.mrf.mxu0
    %v1080 = vadd.f32 %v986, %v1079
    %v1081 = vpop.f32.mrf.mxu0
    %v1082 = vadd.f32 %v986, %v1081
    %1083 = vmatmul.bf16.gmra.mxu0 %v953
    %v1084 = vpop.f32.mrf.mxu0
    %v1085 = vadd.f32 %v986, %v1084
    %v1086 = vpop.f32.mrf.mxu0
    %v1087 = vadd.f32 %v986, %v1086
    %1088 = vmatmul.bf16.gmra.mxu0 %v954
    %v1089 = vpop.f32.mrf.mxu0
    %v1090 = vadd.f32 %v986, %v1089
    %v1091 = vpop.f32.mrf.mxu0
    %v1092 = vadd.f32 %v986, %v1091
    %1093 = vmatmul.bf16.gmra.mxu0 %v955
    %v1094 = vpop.f32.mrf.mxu0
    %v1095 = vadd.f32 %v986, %v1094
    %v1096 = vpop.f32.mrf.mxu0
    %v1097 = vadd.f32 %v986, %v1096
    %1098 = vmatmul.bf16.gmra.mxu0 %v956
    %v1099 = vpop.f32.mrf.mxu0
    %v1100 = vadd.f32 %v986, %v1099
    %v1101 = vpop.f32.mrf.mxu0
    %v1102 = vadd.f32 %v986, %v1101
    %1103 = vmatmul.bf16.gmra.mxu0 %v957
    %v1104 = vpop.f32.mrf.mxu0
    %v1105 = vadd.f32 %v986, %v1104
    %v1106 = vpop.f32.mrf.mxu0
    %v1107 = vadd.f32 %v986, %v1106
    %1108 = vmatmul.bf16.gmra.mxu0 %v958
    %v1109 = vpop.f32.mrf.mxu0
    %v1110 = vadd.f32 %v986, %v1109
    %v1111 = vpop.f32.mrf.mxu0
    %v1112 = vadd.f32 %v986, %v1111
    %1113 = vmatmul.bf16.gmra.mxu0 %v959
    %v1114 = vpop.f32.mrf.mxu0
    %v1115 = vadd.f32 %v986, %v1114
    %v1116 = vpop.f32.mrf.mxu0
    %v1117 = vadd.f32 %v986, %v1116
    %1118 = vmatmul.bf16.gmra.mxu0 %v960
    %v1119 = vpop.f32.mrf.mxu0
    %v1120 = vadd.f32 %v986, %v1119
    %v1121 = vpop.f32.mrf.mxu0
    %v1122 = vadd.f32 %v986, %v1121
    %1123 = vmatmul.bf16.gmra.mxu0 %v961
    %v1124 = vpop.f32.mrf.mxu0
    %v1125 = vadd.f32 %v986, %v1124
    %v1126 = vpop.f32.mrf.mxu0
    %v1127 = vadd.f32 %v986, %v1126
    %1128 = vmatmul.bf16.gmra.mxu0 %v962
    %v1129 = vpop.f32.mrf.mxu0
    %v1130 = vadd.f32 %v986, %v1129
    %v1131 = vpop.f32.mrf.mxu0
    %v1132 = vadd.f32 %v986, %v1131
    %1133 = vmatmul.bf16.gmra.mxu0 %v963
    %v1134 = vpop.f32.mrf.mxu0
    %v1135 = vadd.f32 %v986, %v1134
    %v1136 = vpop.f32.mrf.mxu0
    %v1137 = vadd.f32 %v986, %v1136
    %1138 = vmatmul.bf16.gmra.mxu0 %v964
    %v1139 = vpop.f32.mrf.mxu0
    %v1140 = vadd.f32 %v986, %v1139
    %v1141 = vpop.f32.mrf.mxu0
    %v1142 = vadd.f32 %v986, %v1141
    %1143 = vmatmul.bf16.gmra.mxu0 %v965
    %v1144 = vpop.f32.mrf.mxu0
    %v1145 = vadd.f32 %v986, %v1144
    %v1146 = vpop.f32.mrf.mxu0
    %v1147 = vadd.f32 %v986, %v1146
    %1148 = vmatmul.bf16.gmra.mxu0 %v966
    %v1149 = vpop.f32.mrf.mxu0
    %v1150 = vadd.f32 %v986, %v1149
    %v1151 = vpop.f32.mrf.mxu0
    %v1152 = vadd.f32 %v986, %v1151
    %1153 = vmatmul.bf16.gmra.mxu0 %v967
    %v1154 = vpop.f32.mrf.mxu0
    %v1155 = vadd.f32 %v986, %v1154
    %v1156 = vpop.f32.mrf.mxu0
    %v1157 = vadd.f32 %v986, %v1156
    %1158 = vdwg.mxu0
    %1159 = vmatpush.bf16.msra.mxu0 %v1053
    %1160 = vmatpush.bf16.msra.mxu0 %v1051
    %1161 = vmatpush.bf16.msra.mxu0 %v1049
    %1162 = vmatpush.bf16.msra.mxu0 %v1047
    %1163 = vmatpush.bf16.msra.mxu0 %v1045
    %1164 = vmatpush.bf16.msra.mxu0 %v1043
    %1165 = vmatpush.bf16.msra.mxu0 %v1041
    %1166 = vmatpush.bf16.msra.mxu0 %v1039
    %1167 = vmatmul.bf16.gmra.mxu0 %v952
    %v1168 = vpop.f32.mrf.mxu0
    %v1169 = vadd.f32 %v987, %v1168
    %v1170 = vpop.f32.mrf.mxu0
    %v1171 = vadd.f32 %v987, %v1170
    %1172 = vmatmul.bf16.gmra.mxu0 %v953
    %v1173 = vpop.f32.mrf.mxu0
    %v1174 = vadd.f32 %v987, %v1173
    %v1175 = vpop.f32.mrf.mxu0
    %v1176 = vadd.f32 %v987, %v1175
    %1177 = vmatmul.bf16.gmra.mxu0 %v954
    %v1178 = vpop.f32.mrf.mxu0
    %v1179 = vadd.f32 %v987, %v1178
    %v1180 = vpop.f32.mrf.mxu0
    %v1181 = vadd.f32 %v987, %v1180
    %1182 = vmatmul.bf16.gmra.mxu0 %v955
    %v1183 = vpop.f32.mrf.mxu0
    %v1184 = vadd.f32 %v987, %v1183
    %v1185 = vpop.f32.mrf.mxu0
    %v1186 = vadd.f32 %v987, %v1185
    %1187 = vmatmul.bf16.gmra.mxu0 %v956
    %v1188 = vpop.f32.mrf.mxu0
    %v1189 = vadd.f32 %v987, %v1188
    %v1190 = vpop.f32.mrf.mxu0
    %v1191 = vadd.f32 %v987, %v1190
    %1192 = vmatmul.bf16.gmra.mxu0 %v957
    %v1193 = vpop.f32.mrf.mxu0
    %v1194 = vadd.f32 %v987, %v1193
    %v1195 = vpop.f32.mrf.mxu0
    %v1196 = vadd.f32 %v987, %v1195
    %1197 = vmatmul.bf16.gmra.mxu0 %v958
    %v1198 = vpop.f32.mrf.mxu0
    %v1199 = vadd.f32 %v987, %v1198
    %v1200 = vpop.f32.mrf.mxu0
    %v1201 = vadd.f32 %v987, %v1200
    %1202 = vmatmul.bf16.gmra.mxu0 %v959
    %v1203 = vpop.f32.mrf.mxu0
    %v1204 = vadd.f32 %v987, %v1203
    %v1205 = vpop.f32.mrf.mxu0
    %v1206 = vadd.f32 %v987, %v1205
    %1207 = vmatmul.bf16.gmra.mxu0 %v960
    %v1208 = vpop.f32.mrf.mxu0
    %v1209 = vadd.f32 %v987, %v1208
    %v1210 = vpop.f32.mrf.mxu0
    %v1211 = vadd.f32 %v987, %v1210
    %1212 = vmatmul.bf16.gmra.mxu0 %v961
    %v1213 = vpop.f32.mrf.mxu0
    %v1214 = vadd.f32 %v987, %v1213
    %v1215 = vpop.f32.mrf.mxu0
    %v1216 = vadd.f32 %v987, %v1215
    %1217 = vmatmul.bf16.gmra.mxu0 %v962
    %v1218 = vpop.f32.mrf.mxu0
    %v1219 = vadd.f32 %v987, %v1218
    %v1220 = vpop.f32.mrf.mxu0
    %v1221 = vadd.f32 %v987, %v1220
    %1222 = vmatmul.bf16.gmra.mxu0 %v963
    %v1223 = vpop.f32.mrf.mxu0
    %v1224 = vadd.f32 %v987, %v1223
    %v1225 = vpop.f32.mrf.mxu0
    %v1226 = vadd.f32 %v987, %v1225
    %1227 = vmatmul.bf16.gmra.mxu0 %v964
    %v1228 = vpop.f32.mrf.mxu0
    %v1229 = vadd.f32 %v987, %v1228
    %v1230 = vpop.f32.mrf.mxu0
    %v1231 = vadd.f32 %v987, %v1230
    %1232 = vmatmul.bf16.gmra.mxu0 %v965
    %v1233 = vpop.f32.mrf.mxu0
    %v1234 = vadd.f32 %v987, %v1233
    %v1235 = vpop.f32.mrf.mxu0
    %v1236 = vadd.f32 %v987, %v1235
    %1237 = vmatmul.bf16.gmra.mxu0 %v966
    %v1238 = vpop.f32.mrf.mxu0
    %v1239 = vadd.f32 %v987, %v1238
    %v1240 = vpop.f32.mrf.mxu0
    %v1241 = vadd.f32 %v987, %v1240
    %1242 = vmatmul.bf16.gmra.mxu0 %v967
    %v1243 = vpop.f32.mrf.mxu0
    %v1244 = vadd.f32 %v987, %v1243
    %v1245 = vpop.f32.mrf.mxu0
    %v1246 = vadd.f32 %v987, %v1245
    %1247 = vdwg.mxu0
    %v1248 = vtanh.pop %v1080
    %v1249 = vtanh.pop %v1169
    %v1250 = vtanh.pop %v1082
    %v1251 = vtanh.pop %v1171
    %v1252 = vtanh.pop %v1085
    %v1253 = vtanh.pop %v1174
    %v1254 = vtanh.pop %v1087
    %v1255 = vtanh.pop %v1176
    %v1256 = vtanh.pop %v1090
    %v1257 = vtanh.pop %v1179
    %v1258 = vtanh.pop %v1092
    %v1259 = vtanh.pop %v1181
    %v1260 = vtanh.pop %v1095
    %v1261 = vtanh.pop %v1184
    %v1262 = vtanh.pop %v1097
    %v1263 = vtanh.pop %v1186
    %v1264 = vtanh.pop %v1100
    %v1265 = vtanh.pop %v1189
    %v1266 = vtanh.pop %v1102
    %v1267 = vtanh.pop %v1191
    %v1268 = vtanh.pop %v1105
    %v1269 = vtanh.pop %v1194
    %v1270 = vtanh.pop %v1107
    %v1271 = vtanh.pop %v1196
    %v1272 = vtanh.pop %v1110
    %v1273 = vtanh.pop %v1199
    %v1274 = vtanh.pop %v1112
    %v1275 = vtanh.pop %v1201
    %v1276 = vtanh.pop %v1115
    %v1277 = vtanh.pop %v1204
    %v1278 = vtanh.pop %v1117
    %v1279 = vtanh.pop %v1206
    %v1280 = vtanh.pop %v1120
    %v1281 = vtanh.pop %v1209
    %v1282 = vtanh.pop %v1122
    %v1283 = vtanh.pop %v1211
    %v1284 = vtanh.pop %v1125
    %v1285 = vtanh.pop %v1214
    %v1286 = vtanh.pop %v1127
    %v1287 = vtanh.pop %v1216
    %v1288 = vtanh.pop %v1130
    %v1289 = vtanh.pop %v1219
    %v1290 = vtanh.pop %v1132
    %v1291 = vtanh.pop %v1221
    %v1292 = vtanh.pop %v1135
    %v1293 = vtanh.pop %v1224
    %v1294 = vtanh.pop %v1137
    %v1295 = vtanh.pop %v1226
    %v1296 = vtanh.pop %v1140
    %v1297 = vtanh.pop %v1229
    %v1298 = vtanh.pop %v1142
    %v1299 = vtanh.pop %v1231
    %v1300 = vtanh.pop %v1145
    %v1301 = vtanh.pop %v1234
    %v1302 = vtanh.pop %v1147
    %v1303 = vtanh.pop %v1236
    %v1304 = vtanh.pop %v1150
    %v1305 = vtanh.pop %v1239
    %v1306 = vtanh.pop %v1152
    %v1307 = vtanh.pop %v1241
    %v1308 = vtanh.pop %v1155
    %v1309 = vtanh.pop %v1244
    %v1310 = vtanh.pop %v1157
    %v1311 = vtanh.pop %v1246
    %v1312 = vpack.c.bf16 %v1249, %v1248
    %v1313 = vpack.c.bf16 %v1251, %v1250
    %v1314 = vpack.c.bf16 %v1253, %v1252
    %v1315 = vpack.c.bf16 %v1255, %v1254
    %v1316 = vpack.c.bf16 %v1257, %v1256
    %v1317 = vpack.c.bf16 %v1259, %v1258
    %v1318 = vpack.c.bf16 %v1261, %v1260
    %v1319 = vpack.c.bf16 %v1263, %v1262
    %v1320 = vpack.c.bf16 %v1265, %v1264
    %v1321 = vpack.c.bf16 %v1267, %v1266
    %v1322 = vpack.c.bf16 %v1269, %v1268
    %v1323 = vpack.c.bf16 %v1271, %v1270
    %v1324 = vpack.c.bf16 %v1273, %v1272
    %v1325 = vpack.c.bf16 %v1275, %v1274
    %v1326 = vpack.c.bf16 %v1277, %v1276
    %v1327 = vpack.c.bf16 %v1279, %v1278
    %v1328 = vpack.c.bf16 %v1281, %v1280
    %v1329 = vpack.c.bf16 %v1283, %v1282
    %v1330 = vpack.c.bf16 %v1285, %v1284
    %v1331 = vpack.c.bf16 %v1287, %v1286
    %v1332 = vpack.c.bf16 %v1289, %v1288
    %v1333 = vpack.c.bf16 %v1291, %v1290
    %v1334 = vpack.c.bf16 %v1293, %v1292
    %v1335 = vpack.c.bf16 %v1295, %v1294
    %v1336 = vpack.c.bf16 %v1297, %v1296
    %v1337 = vpack.c.bf16 %v1299, %v1298
    %v1338 = vpack.c.bf16 %v1301, %v1300
    %v1339 = vpack.c.bf16 %v1303, %v1302
    %v1340 = vpack.c.bf16 %v1305, %v1304
    %v1341 = vpack.c.bf16 %v1307, %v1306
    %v1342 = vpack.c.bf16 %v1309, %v1308
    %v1343 = vpack.c.bf16 %v1311, %v1310
    %1344 = vst [vmem:[#allocation2] sm:$0xff] %v1312
    %1345 = vst [vmem:[#allocation2 + $0x8] sm:$0xff] %v1313
    %1346 = vst [vmem:[#allocation2 + $0x10] sm:$0xff] %v1314
    %1347 = vst [vmem:[#allocation2 + $0x18] sm:$0xff] %v1315
    %1348 = vst [vmem:[#allocation2 + $0x20] sm:$0xff] %v1316
    %1349 = vst [vmem:[#allocation2 + $0x28] sm:$0xff] %v1317
    %1350 = vst [vmem:[#allocation2 + $0x30] sm:$0xff] %v1318
    %1351 = vst [vmem:[#allocation2 + $0x38] sm:$0xff] %v1319
    %1352 = vst [vmem:[#allocation2 + $0x40] sm:$0xff] %v1320
    %1353 = vst [vmem:[#allocation2 + $0x48] sm:$0xff] %v1321
    %1354 = vst [vmem:[#allocation2 + $0x50] sm:$0xff] %v1322
    %1355 = vst [vmem:[#allocation2 + $0x58] sm:$0xff] %v1323
    %1356 = vst [vmem:[#allocation2 + $0x60] sm:$0xff] %v1324
    %1357 = vst [vmem:[#allocation2 + $0x68] sm:$0xff] %v1325
    %1358 = vst [vmem:[#allocation2 + $0x70] sm:$0xff] %v1326
    %1359 = vst [vmem:[#allocation2 + $0x78] sm:$0xff] %v1327
    %1360 = vst [vmem:[#allocation2 + $0x80] sm:$0xff] %v1328
    %1361 = vst [vmem:[#allocation2 + $0x88] sm:$0xff] %v1329
    %1362 = vst [vmem:[#allocation2 + $0x90] sm:$0xff] %v1330
    %1363 = vst [vmem:[#allocation2 + $0x98] sm:$0xff] %v1331
    %1364 = vst [vmem:[#allocation2 + $0xa0] sm:$0xff] %v1332
    %1365 = vst [vmem:[#allocation2 + $0xa8] sm:$0xff] %v1333
    %1366 = vst [vmem:[#allocation2 + $0xb0] sm:$0xff] %v1334
    %1367 = vst [vmem:[#allocation2 + $0xb8] sm:$0xff] %v1335
    %1368 = vst [vmem:[#allocation2 + $0xc0] sm:$0xff] %v1336
    %1369 = vst [vmem:[#allocation2 + $0xc8] sm:$0xff] %v1337
    %1370 = vst [vmem:[#allocation2 + $0xd0] sm:$0xff] %v1338
    %1371 = vst [vmem:[#allocation2 + $0xd8] sm:$0xff] %v1339
    %1372 = vst [vmem:[#allocation2 + $0xe0] sm:$0xff] %v1340
    %1373 = vst [vmem:[#allocation2 + $0xe8] sm:$0xff] %v1341
    %1374 = vst [vmem:[#allocation2 + $0xf0] sm:$0xff] %v1342
    %1375 = vst [vmem:[#allocation2 + $0xf8] sm:$0xff] %v1343
    // Predicated region
    $region38: #{gan_lsq_forward.1} parent=1 // pred_check
      _
    $region39: #{gan_lsq_forward.1} parent=1 // pred_check_branch
      %1377 = sbr.rel (0) target = $region41
    $region40: #{gan_lsq_forward.1} parent=1 // pred_region
      %1379 = vsyncadd [#allocation3], 0
      %s1380 = sshll.u32 [#allocation2], 4
      %s1381 = int_to_ptr.vmem [resolvable:$true] %s1380
      %s1382 = sshll.u32 %s9, 4
      %s1383 = int_to_ptr.hbm [resolvable:$true] %s1382
      %1388 = dma.vmem_to_hbm [thread:$0]  %s1381, 4096, %s1383, [#allocation3], 128, 128, 8
    $region41: #{gan_lsq_forward.1} parent=1 // pred_fallthru
      _
    // Predicated region
    $region42: #{gan_lsq_forward.1} parent=1 // pred_check
      _
    $region43: #{gan_lsq_forward.1} parent=1 // pred_check_branch
      %1390 = sbr.rel (0) target = $region45
    $region44: #{gan_lsq_forward.1} parent=1 // pred_region
      %1392 = dma.done [#allocation3], 4096
    $region45: #{gan_lsq_forward.1} parent=1 // pred_fallthru
      _
    %1393 = vsyncpa [#allocation3], 1

</llo_original>
